<compile_context>
chip_gen: v5e
topology: v5e:2x2
jax: 0.10.0
libtpu: 0.0.40
codegen_flags: <defaults>
</compile_context>

<pallas_src>
import functools

import jax
import jax.numpy as jnp
from jax import lax
from jax.experimental import pallas as pl
from jax.experimental.pallas import tpu as pltpu

_NEG_BIG = -1e30  # finite "-inf" sentinel: avoids inf-inf NaNs in the online max


def _round_up(x, m):
    return ((x + m - 1) // m) * m


def _cdiv(a, b):
    return (a + b - 1) // b


def _vmem_budget_bytes():
    """~75% of this generation's per-TensorCore VMEM (v7x: ~48 MiB, v5e/v6e: ~96 MiB)."""
    cap = 64 * 1024 * 1024
    try:
        info = pltpu.get_tpu_info()
        cap = int(getattr(info, "vmem_capacity_bytes", cap) or cap)
    except Exception:
        pass
    return int(0.75 * cap)


def _choose_block_rows(na, target, align):
    """Multiple of `align` near na / ceil(na / target): minimises padded anchor rows."""
    target = max(align, min(int(target), _round_up(na, align)))
    n_blocks = max(1, _cdiv(na, target))
    return _round_up(_cdiv(na, n_blocks), align)


def _vmem_estimate(br, tn, d_pad, mxu_itemsize):
    return (2 * br * d_pad * mxu_itemsize        # anchor tile (double buffered)
            + 2 * d_pad * tn * mxu_itemsize      # streamed contrast tile (double buffered)
            + 2 * (br + tn) * 4                  # label tiles
            + 4 * br * tn * 4                    # f32 temporaries (scores / exp / selects)
            + 12 * br * 4)                       # accumulators + output tile


def _supcon_kernel(a_ref, ct_ref, alab_ref, clab_ref, out_ref,
                   m_ref, l_ref, sp_ref, np_ref, *,
                   inv_temperature, loss_scale, nc_valid):
    j = pl.program_id(1)
    br = a_ref.shape[0]
    tn = ct_ref.shape[1]

    @pl.when(j == 0)
    def _init():
        m_ref[...] = jnp.full(m_ref.shape, _NEG_BIG, m_ref.dtype)
        l_ref[...] = jnp.zeros(l_ref.shape, l_ref.dtype)
        sp_ref[...] = jnp.zeros(sp_ref.shape, sp_ref.dtype)
        np_ref[...] = jnp.zeros(np_ref.shape, np_ref.dtype)

    # [BR, Dp] @ [Dp, TN] on the MXU (bf16 operands by default, f32 accumulate).
    s = jnp.dot(a_ref[...], ct_ref[...], preferred_element_type=jnp.float32)

    # In-kernel masks: VPU compares on a tiny label vector + iota, consumed via
    # where-selects (no f32 mask tensors, no HBM mask traffic).
    row0 = pl.program_id(0) * br
    col0 = j * tn
    col_ids = lax.broadcasted_iota(jnp.int32, (br, tn), 1) + col0
    row_ids = lax.broadcasted_iota(jnp.int32, (br, tn), 0) + row0
    logits_mask = jnp.logical_and(col_ids < nc_valid, col_ids != row_ids)
    pos_mask = jnp.logical_and(alab_ref[...] == clab_ref[...], logits_mask)

    # Online (flash-style) masked softmax denominator.  Row max over the valid
    # non-self columns only: exact by shift invariance and it guarantees the
    # largest surviving term is exp(0) (no denominator underflow).
    m_tile = jnp.max(jnp.where(logits_mask, s, _NEG_BIG), axis=1, keepdims=True)
    m_old = m_ref[...]
    m_new = jnp.maximum(m_old, m_tile)
    p = jnp.where(logits_mask, jnp.exp((s - m_new) * inv_temperature), 0.0)
    alpha = jnp.exp((m_old - m_new) * inv_temperature)
    l_ref[...] = alpha * l_ref[...] + jnp.sum(p, axis=1, keepdims=True)
    m_ref[...] = m_new

    # Positive-pair accumulators in the raw (unshifted) score scale.
    sp_ref[...] += jnp.sum(jnp.where(pos_mask, s, 0.0), axis=1, keepdims=True)
    np_ref[...] += jnp.sum(jnp.where(pos_mask, 1.0, 0.0), axis=1, keepdims=True)

    @pl.when(j == pl.num_programs(1) - 1)
    def _finalize():
        n_pos = np_ref[...]
        n_pos_safe = jnp.where(n_pos < 1e-6, 1.0, n_pos)
        # sum_pos(log_prob) = sum_pos(s)/T - n_pos * (m/T + log(denom))
        mean_log_prob_pos = (
            sp_ref[...] * inv_temperature
            - n_pos * (m_ref[...] * inv_temperature + jnp.log(l_ref[...]))
        ) / n_pos_safe
        out_ref[...] = loss_scale * mean_log_prob_pos      # [BR, 1] per-anchor loss


def supcon_loss(features, labels=None, mask=None, *, temperature=0.07,
                contrast_mode='all', base_temperature=0.07,
                block_rows=256, block_cols=1024, mxu_dtype=jnp.bfloat16):
    features = jnp.asarray(features)
    if features.ndim < 3:
        raise ValueError('`features` needs to be [bsz, n_views, ...]')
    if features.ndim > 3:
        features = features.reshape(features.shape[0], features.shape[1], -1)
    bsz, n_views, d = features.shape

    if labels is not None and mask is not None:
        raise ValueError('Cannot define both `labels` and `mask`')
    if mask is not None:
        # TODO(synk): arbitrary / asymmetric user-provided [bsz, bsz] masks need a
        # tiled-mask input path; only the labels / identity-mask cases lower here.
        raise NotImplementedError('explicit `mask` is not supported by the Pallas kernel')
    if labels is None:
        base_labels = jnp.arange(bsz, dtype=jnp.int32)   # identity mask == unique labels
    else:
        labels = jnp.asarray(labels).reshape(-1)
        if labels.shape[0] != bsz:
            raise ValueError('Num of labels does not match num of features')
        base_labels = labels.astype(jnp.int32)

    # contrast_feature = torch.cat(torch.unbind(features, dim=1)): row = v*bsz + b
    contrast_feature = jnp.concatenate([features[:, v, :] for v in range(n_views)], axis=0)
    contrast_labels = jnp.tile(base_labels, n_views)
    if contrast_mode == 'one':
        anchor_feature, anchor_labels, anchor_count = features[:, 0, :], base_labels, 1
    elif contrast_mode == 'all':
        anchor_feature, anchor_labels, anchor_count = contrast_feature, contrast_labels, n_views
    else:
        raise ValueError(f'Unknown mode: {contrast_mode}')

    na = anchor_count * bsz
    nc = n_views * bsz

    mxu_dtype = jnp.dtype(mxu_dtype)
    mxu_itemsize = mxu_dtype.itemsize
    row_align = 8 if mxu_itemsize >= 4 else (16 if mxu_itemsize == 2 else 32)
    d_pad = _round_up(d, 128)

    # Generation-aware tiling: shrink the column tile (then the row block) until
    # the per-grid-step working set fits ~75% of this core's VMEM.
    budget = _vmem_budget_bytes()
    br = _choose_block_rows(na, block_rows, row_align)
    tn = min(_round_up(nc, 128), _round_up(max(int(block_cols), 128), 128))
    while tn > 128 and _vmem_estimate(br, tn, d_pad, mxu_itemsize) > budget:
        tn = max(128, ((tn // 2) // 128) * 128)
    while br > row_align and _vmem_estimate(br, tn, d_pad, mxu_itemsize) > budget:
        br = max(row_align, _round_up(br // 2, row_align))

    na_pad = _round_up(na, br)
    nc_pad = _round_up(nc, tn)
    n_row_blocks = na_pad // br
    n_col_blocks = nc_pad // tn

    # bf16 (default) matmul operands halve HBM traffic + VMEM tiles and run the
    # MXU at its bf16 peak; the contrast is stored pre-transposed ([Dp, Ncp]) so
    # the MXU gets a native [M,K]@[K,N] (no per-step transpose of the operand).
    a_p = jnp.zeros((na_pad, d_pad), mxu_dtype).at[:na, :d].set(
        anchor_feature.astype(mxu_dtype))
    ct_p = jnp.zeros((d_pad, nc_pad), mxu_dtype).at[:d, :nc].set(
        contrast_feature.astype(mxu_dtype).T)
    alab_p = jnp.full((na_pad, 1), -1, jnp.int32).at[:na, 0].set(anchor_labels)
    clab_p = jnp.full((1, nc_pad), -2, jnp.int32).at[0, :nc].set(contrast_labels)

    kernel = functools.partial(
        _supcon_kernel,
        inv_temperature=float(1.0 / temperature),
        loss_scale=float(-(temperature / base_temperature)),
        nc_valid=nc)

    cost = pl.CostEstimate(
        flops=2 * na_pad * nc_pad * d_pad,
        transcendentals=na_pad * nc_pad + 2 * na_pad * n_col_blocks,
        bytes_accessed=int(a_p.size * mxu_itemsize
                           + n_row_blocks * ct_p.size * mxu_itemsize
                           + 4 * (alab_p.size + n_row_blocks * clab_p.size)
                           + 4 * na_pad))

    vmem_limit = int(min(budget,
                         max(2 * _vmem_estimate(br, tn, d_pad, mxu_itemsize),
                             32 * 1024 * 1024)))

    per_anchor = pl.pallas_call(
        kernel,
        out_shape=jax.ShapeDtypeStruct((na_pad, 1), jnp.float32),
        grid=(n_row_blocks, n_col_blocks),
        in_specs=[
            pl.BlockSpec((br, d_pad), lambda i, j: (i, 0)),   # anchor row tile (resident over j)
            pl.BlockSpec((d_pad, tn), lambda i, j: (0, j)),   # streamed contrast^T tile
            pl.BlockSpec((br, 1), lambda i, j: (i, 0)),       # anchor labels
            pl.BlockSpec((1, tn), lambda i, j: (0, j)),       # contrast labels
        ],
        out_specs=pl.BlockSpec((br, 1), lambda i, j: (i, 0)),
        scratch_shapes=[
            pltpu.VMEM((br, 1), jnp.float32),   # running row max
            pltpu.VMEM((br, 1), jnp.float32),   # running masked softmax denom
            pltpu.VMEM((br, 1), jnp.float32),   # sum of positive-pair scores
            pltpu.VMEM((br, 1), jnp.float32),   # positive-pair count
        ],
        compiler_params=pltpu.CompilerParams(
            dimension_semantics=("parallel", "arbitrary"),
            vmem_limit_bytes=vmem_limit),
        cost_estimate=cost,
    )(a_p, ct_p, alab_p, clab_p)

    # loss.view(anchor_count, bsz).mean() == mean over all Na anchors.
    # Padded anchor rows contribute exactly 0, but we slice them off anyway.
    return jnp.mean(per_anchor[:na, 0])


def _supcon_loss_ref(features, labels=None, *, temperature=0.07,
                     contrast_mode='all', base_temperature=0.07):
    """Pure-JAX reference mirroring the PyTorch code."""
    features = features.reshape(features.shape[0], features.shape[1], -1)
    bsz, n_views, _ = features.shape
    if labels is None:
        base_mask = jnp.eye(bsz, dtype=jnp.float32)
    else:
        labels = labels.reshape(-1, 1)
        base_mask = (labels == labels.T).astype(jnp.float32)
    contrast = jnp.concatenate([features[:, v, :] for v in range(n_views)],
                               axis=0).astype(jnp.float32)
    if contrast_mode == 'one':
        anchor = features[:, 0].astype(jnp.float32)
        anchor_count = 1
    else:
        anchor = contrast
        anchor_count = n_views
    na = anchor_count * bsz
    nc = n_views * bsz
    adc = (anchor @ contrast.T) / temperature
    logits = adc - jnp.max(adc, axis=1, keepdims=True)
    mask = jnp.tile(base_mask, (anchor_count, n_views))
    logits_mask = jnp.where(jnp.arange(nc)[None, :] == jnp.arange(na)[:, None], 0.0, 1.0)
    mask = mask * logits_mask
    exp_logits = jnp.exp(logits) * logits_mask
    log_prob = logits - jnp.log(jnp.sum(exp_logits, axis=1, keepdims=True))
    mpp = jnp.sum(mask, axis=1)
    mpp = jnp.where(mpp < 1e-6, 1.0, mpp)
    mean_lp = jnp.sum(mask * log_prob, axis=1) / mpp
    loss = -(temperature / base_temperature) * mean_lp
    return jnp.mean(loss)


if __name__ == "__main__":
    key = jax.random.PRNGKey(0)
    kf, kl, kf2, kl2 = jax.random.split(key, 4)

    def make_features(k, bsz, n_views, h, w):
        # SupCon expects L2-normalized embeddings; unnormalized inputs make the
        # masked softmax denominator underflow (in the PyTorch reference too).
        raw = jax.random.normal(k, (bsz, n_views, h, w), dtype=jnp.float32)
        flat = raw.reshape(bsz, n_views, -1)
        flat = flat / jnp.linalg.norm(flat, axis=-1, keepdims=True)
        return flat.reshape(bsz, n_views, h, w)

    # Small case: features [8, 2, 4, 8] -> D = 32.
    bsz, n_views, H, W = 8, 2, 4, 8
    features = make_features(kf, bsz, n_views, H, W)
    labels = jax.random.randint(kl, (bsz,), 0, 4, dtype=jnp.int32)

    # Slightly larger case that (with small block sizes) exercises multiple row
    # AND column tiles of the online-softmax accumulation path.
    bsz2 = 80
    features2 = make_features(kf2, bsz2, n_views, H, W)
    labels2 = jax.random.randint(kl2, (bsz2,), 0, 4, dtype=jnp.int32)

    cases = [
        dict(feats=features, labels=labels, mode='all', kw={}),
        dict(feats=features, labels=labels, mode='one', kw={}),
        dict(feats=features, labels=None, mode='all', kw={}),
        dict(feats=features2, labels=labels2, mode='all',
             kw=dict(block_rows=64, block_cols=128)),
    ]

    for cfg in cases:
        # Exact path: f32 MXU operands vs. the f32 reference (tight tolerance).
        got = jax.block_until_ready(
            supcon_loss(cfg['feats'], labels=cfg['labels'],
                        contrast_mode=cfg['mode'], mxu_dtype=jnp.float32,
                        **cfg['kw']))
        want = jax.block_until_ready(
            _supcon_loss_ref(cfg['feats'], labels=cfg['labels'],
                             contrast_mode=cfg['mode']))
        tol = 1e-3 * max(1.0, float(jnp.abs(want)))
        assert bool(jnp.isfinite(got)) and float(jnp.abs(got - want)) < tol, \
            ('f32', cfg['mode'], got, want)

        # Fast path: bf16 MXU operands (f32 accumulate / epilogue) vs. a
        # reference fed the same bf16-rounded features.
        got_bf16 = jax.block_until_ready(
            supcon_loss(cfg['feats'], labels=cfg['labels'],
                        contrast_mode=cfg['mode'], mxu_dtype=jnp.bfloat16,
                        **cfg['kw']))
        feats_q = cfg['feats'].astype(jnp.bfloat16).astype(jnp.float32)
        want_q = jax.block_until_ready(
            _supcon_loss_ref(feats_q, labels=cfg['labels'],
                             contrast_mode=cfg['mode']))
        tol_q = 5e-3 * max(1.0, float(jnp.abs(want_q)))
        assert bool(jnp.isfinite(got_bf16)) and float(jnp.abs(got_bf16 - want_q)) < tol_q, \
            ('bf16', cfg['mode'], got_bf16, want_q)

    print("KERNEL_OK")
</pallas_src>

<mosaic_0001>
module attributes {stable_mosaic.version = 11 : i64} {
  func.func @_supcon_kernel(%arg0: i32, %arg1: i32, %arg2: memref<16x128xf32, #tpu.memory_space<vmem>>, %arg3: memref<128x128xf32, #tpu.memory_space<vmem>>, %arg4: memref<16x1xi32, #tpu.memory_space<vmem>>, %arg5: memref<1x128xi32, #tpu.memory_space<vmem>>, %arg6: memref<16x1xf32, #tpu.memory_space<vmem>>, %arg7: memref<16x1xf32, #tpu.memory_space<vmem>>, %arg8: memref<16x1xf32, #tpu.memory_space<vmem>>, %arg9: memref<16x1xf32, #tpu.memory_space<vmem>>, %arg10: memref<16x1xf32, #tpu.memory_space<vmem>>) attributes {dimension_semantics = [#tpu.dimension_semantics<parallel>, #tpu.dimension_semantics<arbitrary>], iteration_bounds = array<i64: 1, 1>, scalar_prefetch = 0 : i64, scratch_operands = 4 : i64, tpu.core_type = #tpu.core_type<tc>, window_params = [{transform_indices = @transform_0, window_bounds = array<i64: 16, 128>}, {transform_indices = @transform_1, window_bounds = array<i64: 128, 128>}, {transform_indices = @transform_2, window_bounds = array<i64: 16, 1>}, {transform_indices = @transform_3, window_bounds = array<i64: 1, 128>}, {transform_indices = @transform_4, window_bounds = array<i64: 16, 1>}]} {
    %c0_i32 = arith.constant 0 : i32
    %0 = arith.cmpi eq, %arg1, %c0_i32 : i32
    %1 = arith.extui %0 : i1 to i32
    %c0_i32_0 = arith.constant 0 : i32
    %2 = arith.cmpi ne, %1, %c0_i32_0 : i32
    scf.if %2 {
      %cst_38 = arith.constant -1.000000e+30 : f32
      %66 = vector.broadcast %cst_38 : f32 to vector<16x1xf32>
      %c0_39 = arith.constant 0 : index
      %c0_40 = arith.constant 0 : index
      %67 = vector.load %arg7[%c0_39, %c0_40] : memref<16x1xf32, #tpu.memory_space<vmem>>, vector<16x1xf32>
      tpu.vector_store %arg7[%c0_39, %c0_40], %66 {strides = array<i32>} : memref<16x1xf32, #tpu.memory_space<vmem>>, vector<16x1xf32>,
      %cst_41 = arith.constant 0.000000e+00 : f32
      %68 = vector.broadcast %cst_41 : f32 to vector<16x1xf32>
      %c0_42 = arith.constant 0 : index
      %c0_43 = arith.constant 0 : index
      %69 = vector.load %arg8[%c0_42, %c0_43] : memref<16x1xf32, #tpu.memory_space<vmem>>, vector<16x1xf32>
      tpu.vector_store %arg8[%c0_42, %c0_43], %68 {strides = array<i32>} : memref<16x1xf32, #tpu.memory_space<vmem>>, vector<16x1xf32>,
      %cst_44 = arith.constant 0.000000e+00 : f32
      %70 = vector.broadcast %cst_44 : f32 to vector<16x1xf32>
      %c0_45 = arith.constant 0 : index
      %c0_46 = arith.constant 0 : index
      %71 = vector.load %arg9[%c0_45, %c0_46] : memref<16x1xf32, #tpu.memory_space<vmem>>, vector<16x1xf32>
      tpu.vector_store %arg9[%c0_45, %c0_46], %70 {strides = array<i32>} : memref<16x1xf32, #tpu.memory_space<vmem>>, vector<16x1xf32>,
      %cst_47 = arith.constant 0.000000e+00 : f32
      %72 = vector.broadcast %cst_47 : f32 to vector<16x1xf32>
      %c0_48 = arith.constant 0 : index
      %c0_49 = arith.constant 0 : index
      %73 = vector.load %arg10[%c0_48, %c0_49] : memref<16x1xf32, #tpu.memory_space<vmem>>, vector<16x1xf32>
      tpu.vector_store %arg10[%c0_48, %c0_49], %72 {strides = array<i32>} : memref<16x1xf32, #tpu.memory_space<vmem>>, vector<16x1xf32>,
    } else {
    }
    %c0 = arith.constant 0 : index
    %c0_1 = arith.constant 0 : index
    %3 = vector.load %arg2[%c0, %c0_1] : memref<16x128xf32, #tpu.memory_space<vmem>>, vector<16x128xf32>
    %c0_2 = arith.constant 0 : index
    %c0_3 = arith.constant 0 : index
    %4 = vector.load %arg3[%c0_2, %c0_3] : memref<128x128xf32, #tpu.memory_space<vmem>>, vector<128x128xf32>
    %cst = arith.constant dense<0.000000e+00> : vector<16x128xf32>
    %5 = tpu.matmul %3, %4, %cst {dimension_numbers = #tpu.dot_dimension_numbers<[1], [0], [0], [1], [0, 0, 1, 1], [], []>} : vector<16x128xf32>, vector<128x128xf32>, vector<16x128xf32> -> vector<16x128xf32>
    %c16_i32 = arith.constant 16 : i32
    %6 = arith.muli %arg0, %c16_i32 : i32
    %c128_i32 = arith.constant 128 : i32
    %7 = arith.muli %arg1, %c128_i32 : i32
    %8 = tpu.iota {dimensions = array<i32: 1>} : vector<16x128xi32>
    %9 = vector.broadcast %7 : i32 to vector<16x128xi32>
    %10 = arith.addi %8, %9 : vector<16x128xi32>
    %11 = tpu.iota {dimensions = array<i32: 0>} : vector<16x128xi32>
    %12 = vector.broadcast %6 : i32 to vector<16x128xi32>
    %13 = arith.addi %11, %12 : vector<16x128xi32>
    %c16_i32_4 = arith.constant 16 : i32
    %14 = vector.broadcast %c16_i32_4 : i32 to vector<16x128xi32>
    %15 = arith.cmpi slt, %10, %14 : vector<16x128xi32>
    %16 = arith.cmpi ne, %10, %13 : vector<16x128xi32>
    %17 = arith.andi %15, %16 : vector<16x128xi1>
    %c0_5 = arith.constant 0 : index
    %c0_6 = arith.constant 0 : index
    %18 = vector.load %arg4[%c0_5, %c0_6] : memref<16x1xi32, #tpu.memory_space<vmem>>, vector<16x1xi32>
    %c0_7 = arith.constant 0 : index
    %c0_8 = arith.constant 0 : index
    %19 = vector.load %arg5[%c0_7, %c0_8] : memref<1x128xi32, #tpu.memory_space<vmem>>, vector<1x128xi32>
    %20 = vector.broadcast %18 : vector<16x1xi32> to vector<16x128xi32>
    %21 = vector.broadcast %19 : vector<1x128xi32> to vector<16x128xi32>
    %22 = arith.cmpi eq, %20, %21 : vector<16x128xi32>
    %23 = arith.andi %22, %17 : vector<16x128xi1>
    %cst_9 = arith.constant -1.000000e+30 : f32
    %24 = vector.broadcast %cst_9 : f32 to vector<16x128xf32>
    %25 = arith.select %17, %5, %24 : vector<16x128xi1>, vector<16x128xf32>
    %cst_10 = arith.constant dense<0xFF800000> : vector<16xf32>
    %26 = vector.multi_reduction <maximumf>, %25, %cst_10 [1] : vector<16x128xf32> to vector<16xf32>
    %27 = vector.shape_cast %26 : vector<16xf32> to vector<16x1xf32>
    %c0_11 = arith.constant 0 : index
    %c0_12 = arith.constant 0 : index
    %28 = vector.load %arg7[%c0_11, %c0_12] : memref<16x1xf32, #tpu.memory_space<vmem>>, vector<16x1xf32>
    %29 = arith.maximumf %28, %27 : vector<16x1xf32>
    %30 = vector.broadcast %29 : vector<16x1xf32> to vector<16x128xf32>
    %31 = arith.subf %5, %30 : vector<16x128xf32>
    %cst_13 = arith.constant 14.2857141 : f32
    %32 = vector.broadcast %cst_13 : f32 to vector<16x128xf32>
    %33 = arith.mulf %31, %32 : vector<16x128xf32>
    %34 = math.exp %33 : vector<16x128xf32>
    %cst_14 = arith.constant 0.000000e+00 : f32
    %35 = vector.broadcast %cst_14 : f32 to vector<16x128xf32>
    %36 = arith.select %17, %34, %35 : vector<16x128xi1>, vector<16x128xf32>
    %37 = arith.subf %28, %29 : vector<16x1xf32>
    %cst_15 = arith.constant 14.2857141 : f32
    %38 = vector.broadcast %cst_15 : f32 to vector<16x1xf32>
    %39 = arith.mulf %37, %38 : vector<16x1xf32>
    %40 = math.exp %39 : vector<16x1xf32>
    %c0_16 = arith.constant 0 : index
    %c0_17 = arith.constant 0 : index
    %41 = vector.load %arg8[%c0_16, %c0_17] : memref<16x1xf32, #tpu.memory_space<vmem>>, vector<16x1xf32>
    %42 = arith.mulf %40, %41 : vector<16x1xf32>
    %cst_18 = arith.constant dense<0.000000e+00> : vector<16xf32>
    %43 = vector.multi_reduction <add>, %36, %cst_18 [1] : vector<16x128xf32> to vector<16xf32>
    %44 = vector.shape_cast %43 : vector<16xf32> to vector<16x1xf32>
    %45 = arith.addf %42, %44 : vector<16x1xf32>
    %c0_19 = arith.constant 0 : index
    %c0_20 = arith.constant 0 : index
    %46 = vector.load %arg8[%c0_19, %c0_20] : memref<16x1xf32, #tpu.memory_space<vmem>>, vector<16x1xf32>
    tpu.vector_store %arg8[%c0_19, %c0_20], %45 {strides = array<i32>} : memref<16x1xf32, #tpu.memory_space<vmem>>, vector<16x1xf32>,
    %c0_21 = arith.constant 0 : index
    %c0_22 = arith.constant 0 : index
    %47 = vector.load %arg7[%c0_21, %c0_22] : memref<16x1xf32, #tpu.memory_space<vmem>>, vector<16x1xf32>
    tpu.vector_store %arg7[%c0_21, %c0_22], %29 {strides = array<i32>} : memref<16x1xf32, #tpu.memory_space<vmem>>, vector<16x1xf32>,
    %c0_23 = arith.constant 0 : index
    %c0_24 = arith.constant 0 : index
    %48 = vector.load %arg9[%c0_23, %c0_24] : memref<16x1xf32, #tpu.memory_space<vmem>>, vector<16x1xf32>
    %cst_25 = arith.constant 0.000000e+00 : f32
    %49 = vector.broadcast %cst_25 : f32 to vector<16x128xf32>
    %50 = arith.select %23, %5, %49 : vector<16x128xi1>, vector<16x128xf32>
    %cst_26 = arith.constant dense<0.000000e+00> : vector<16xf32>
    %51 = vector.multi_reduction <add>, %50, %cst_26 [1] : vector<16x128xf32> to vector<16xf32>
    %52 = vector.shape_cast %51 : vector<16xf32> to vector<16x1xf32>
    %53 = arith.addf %48, %52 : vector<16x1xf32>
    %c0_27 = arith.constant 0 : index
    %c0_28 = arith.constant 0 : index
    %54 = vector.load %arg9[%c0_27, %c0_28] : memref<16x1xf32, #tpu.memory_space<vmem>>, vector<16x1xf32>
    tpu.vector_store %arg9[%c0_27, %c0_28], %53 {strides = array<i32>} : memref<16x1xf32, #tpu.memory_space<vmem>>, vector<16x1xf32>,
    %c0_29 = arith.constant 0 : index
    %c0_30 = arith.constant 0 : index
    %55 = vector.load %arg10[%c0_29, %c0_30] : memref<16x1xf32, #tpu.memory_space<vmem>>, vector<16x1xf32>
    %cst_31 = arith.constant 1.000000e+00 : f32
    %cst_32 = arith.constant 0.000000e+00 : f32
    %56 = vector.broadcast %cst_31 : f32 to vector<16x128xf32>
    %57 = vector.broadcast %cst_32 : f32 to vector<16x128xf32>
    %58 = arith.select %23, %56, %57 : vector<16x128xi1>, vector<16x128xf32>
    %cst_33 = arith.constant dense<0.000000e+00> : vector<16xf32>
    %59 = vector.multi_reduction <add>, %58, %cst_33 [1] : vector<16x128xf32> to vector<16xf32>
    %60 = vector.shape_cast %59 : vector<16xf32> to vector<16x1xf32>
    %61 = arith.addf %55, %60 : vector<16x1xf32>
    %c0_34 = arith.constant 0 : index
    %c0_35 = arith.constant 0 : index
    %62 = vector.load %arg10[%c0_34, %c0_35] : memref<16x1xf32, #tpu.memory_space<vmem>>, vector<16x1xf32>
    tpu.vector_store %arg10[%c0_34, %c0_35], %61 {strides = array<i32>} : memref<16x1xf32, #tpu.memory_space<vmem>>, vector<16x1xf32>,
    %c0_i32_36 = arith.constant 0 : i32
    %63 = arith.cmpi eq, %arg1, %c0_i32_36 : i32
    %64 = arith.extui %63 : i1 to i32
    %c0_i32_37 = arith.constant 0 : i32
    %65 = arith.cmpi ne, %64, %c0_i32_37 : i32
    scf.if %65 {
      %c0_38 = arith.constant 0 : index
      %c0_39 = arith.constant 0 : index
      %66 = vector.load %arg10[%c0_38, %c0_39] : memref<16x1xf32, #tpu.memory_space<vmem>>, vector<16x1xf32>
      %cst_40 = arith.constant 9.99999997E-7 : f32
      %67 = vector.broadcast %cst_40 : f32 to vector<16x1xf32>
      %68 = arith.cmpf olt, %66, %67 : vector<16x1xf32>
      %cst_41 = arith.constant 1.000000e+00 : f32
      %69 = vector.broadcast %cst_41 : f32 to vector<16x1xf32>
      %70 = arith.select %68, %69, %66 : vector<16x1xi1>, vector<16x1xf32>
      %c0_42 = arith.constant 0 : index
      %c0_43 = arith.constant 0 : index
      %71 = vector.load %arg9[%c0_42, %c0_43] : memref<16x1xf32, #tpu.memory_space<vmem>>, vector<16x1xf32>
      %cst_44 = arith.constant 14.2857141 : f32
      %72 = vector.broadcast %cst_44 : f32 to vector<16x1xf32>
      %73 = arith.mulf %71, %72 : vector<16x1xf32>
      %c0_45 = arith.constant 0 : index
      %c0_46 = arith.constant 0 : index
      %74 = vector.load %arg7[%c0_45, %c0_46] : memref<16x1xf32, #tpu.memory_space<vmem>>, vector<16x1xf32>
      %cst_47 = arith.constant 14.2857141 : f32
      %75 = vector.broadcast %cst_47 : f32 to vector<16x1xf32>
      %76 = arith.mulf %74, %75 : vector<16x1xf32>
      %c0_48 = arith.constant 0 : index
      %c0_49 = arith.constant 0 : index
      %77 = vector.load %arg8[%c0_48, %c0_49] : memref<16x1xf32, #tpu.memory_space<vmem>>, vector<16x1xf32>
      %78 = math.log %77 : vector<16x1xf32>
      %79 = arith.addf %76, %78 : vector<16x1xf32>
      %80 = arith.mulf %66, %79 : vector<16x1xf32>
      %81 = arith.subf %73, %80 : vector<16x1xf32>
      %82 = arith.divf %81, %70 : vector<16x1xf32>
      %cst_50 = arith.constant -1.000000e+00 : f32
      %83 = vector.broadcast %cst_50 : f32 to vector<16x1xf32>
      %84 = arith.mulf %83, %82 : vector<16x1xf32>
      %c0_51 = arith.constant 0 : index
      %c0_52 = arith.constant 0 : index
      %85 = vector.load %arg6[%c0_51, %c0_52] : memref<16x1xf32, #tpu.memory_space<vmem>>, vector<16x1xf32>
      tpu.vector_store %arg6[%c0_51, %c0_52], %84 {strides = array<i32>} : memref<16x1xf32, #tpu.memory_space<vmem>>, vector<16x1xf32>,
    } else {
    }
    return
  }
  func.func @transform_0(%arg0: i32, %arg1: i32) -> (i32, i32) {
    %c0_i32 = arith.constant 0 : i32
    %c0_i32_0 = arith.constant 0 : i32
    return %arg0, %c0_i32 : i32, i32
  }
  func.func @transform_1(%arg0: i32, %arg1: i32) -> (i32, i32) {
    %c0_i32 = arith.constant 0 : i32
    %c0_i32_0 = arith.constant 0 : i32
    return %c0_i32, %arg1 : i32, i32
  }
  func.func @transform_2(%arg0: i32, %arg1: i32) -> (i32, i32) {
    %c0_i32 = arith.constant 0 : i32
    %c0_i32_0 = arith.constant 0 : i32
    return %arg0, %c0_i32 : i32, i32
  }
  func.func @transform_3(%arg0: i32, %arg1: i32) -> (i32, i32) {
    %c0_i32 = arith.constant 0 : i32
    %c0_i32_0 = arith.constant 0 : i32
    return %c0_i32, %arg1 : i32, i32
  }
  func.func @transform_4(%arg0: i32, %arg1: i32) -> (i32, i32) {
    %c0_i32 = arith.constant 0 : i32
    %c0_i32_0 = arith.constant 0 : i32
    return %arg0, %c0_i32 : i32, i32
  }
}

</mosaic_0001>

<llo_original>
// kernel: tpu_custom_call.1
$region0: #{tpu_custom_call.1}
  #allocation0 [shape = 'u32[]', space=smem, size = 0x4, offset = 0x4, fixed_abs, tag = 'smem constant byte address 0x4 - core index']
  #allocation1 [shape = 'u32[72,128]{1,0:T(1,128)}', space=vmem, size = 0x9000, scoped, tag = 'internal scratch']
  #allocation2 [shape = 'f32[16,1]{1,0:T(8,128)}', space=vmem, size = 0x2000, scoped, tag = 'scratch operand']
  #allocation3 [shape = 'f32[16,1]{1,0:T(8,128)}', space=vmem, size = 0x2000, scoped, tag = 'scratch operand']
  #allocation4 [shape = 'f32[16,1]{1,0:T(8,128)}', space=vmem, size = 0x2000, scoped, tag = 'scratch operand']
  #allocation5 [shape = 'f32[16,1]{1,0:T(8,128)}', space=vmem, size = 0x2000, scoped, tag = 'scratch operand']
  %s0 = inlined_call_operand.vmem [shape: f32[16,128], index: 0, kind: input, shape index: {}]
  %s1 = inlined_call_operand.hbm [shape: f32[128,128], index: 1, kind: input, shape index: {}]
  %s2 = inlined_call_operand.vmem [shape: s32[16,1], index: 2, kind: input, shape index: {}]
  %s3 = inlined_call_operand.vmem [shape: s32[1,128], index: 3, kind: input, shape index: {}]
  %s4 = inlined_call_operand.vmem [shape: f32[16,1], index: 4, kind: output, shape index: {}]
  %s5 = sld [smem:[#allocation0]]
  $region38: #{tpu_custom_call.1} parent=0
    _
  %s7 = ssub.s32 1, %s5
  %s8 = scalar_select 0, %s7, %s5
  $region1: #{tpu_custom_call.1} parent=0
    #allocation6 [shape = 'u8[65536]{0}', space=vmem, size = 0x10000, scoped, tag = 'input window, operand 1, single buffered']
    #allocation7 [shape = 's32[1]{0}', space=sflag, size = 0x4, scoped, tag = 'scoped memory for tpu_custom_call.1']
    %9 = vsyncpa [#allocation7], 0
    // Predicated region
    $region2: #{tpu_custom_call.1} parent=1 // pred_check
      _
    $region3: #{tpu_custom_call.1} parent=1 // pred_check_branch
      %11 = sbr.rel (0) target = $region5
    $region4: #{tpu_custom_call.1} parent=1 // pred_region
      _
    $region5: #{tpu_custom_call.1} parent=1 // pred_fallthru
      _
    // Predicated region
    $region6: #{tpu_custom_call.1} parent=1 // pred_check
      _
    $region7: #{tpu_custom_call.1} parent=1 // pred_check_branch
      %13 = sbr.rel (0) target = $region9
    $region8: #{tpu_custom_call.1} parent=1 // pred_region
      %15 = vsyncadd [#allocation7], 0
      %s16 = sshll.u32 %s1, 4
      %s17 = int_to_ptr.hbm [resolvable:$true] %s16
      %s18 = sshll.u32 [#allocation6], 4
      %s19 = int_to_ptr.vmem [resolvable:$true] %s18
      %24 = dma.hbm_to_vmem [thread:$0]  %s17, 2048, %s19, [#allocation7], 128, 128, 8
    $region9: #{tpu_custom_call.1} parent=1 // pred_fallthru
      _
    // Predicated region
    $region10: #{tpu_custom_call.1} parent=1 // pred_check
      _
    $region11: #{tpu_custom_call.1} parent=1 // pred_check_branch
      %26 = sbr.rel (0) target = $region13
    $region12: #{tpu_custom_call.1} parent=1 // pred_region
      _
    $region13: #{tpu_custom_call.1} parent=1 // pred_fallthru
      _
    // Predicated region
    $region14: #{tpu_custom_call.1} parent=1 // pred_check
      _
    $region15: #{tpu_custom_call.1} parent=1 // pred_check_branch
      %28 = sbr.rel (0) target = $region17
    $region16: #{tpu_custom_call.1} parent=1 // pred_region
      _
    $region17: #{tpu_custom_call.1} parent=1 // pred_fallthru
      _
    // Predicated region
    $region18: #{tpu_custom_call.1} parent=1 // pred_check
      _
    $region19: #{tpu_custom_call.1} parent=1 // pred_check_branch
      %30 = sbr.rel (0) target = $region21
    $region20: #{tpu_custom_call.1} parent=1 // pred_region
      %32 = dma.done [#allocation7], 2048
    $region21: #{tpu_custom_call.1} parent=1 // pred_fallthru
      _
    %p33 = scmp.eq.s32.totalorder 0, 0
    // Predicated region
    $region22: #{tpu_custom_call.1} parent=1 // pred_check
      %p34 = pneg %p33
    $region23: #{tpu_custom_call.1} parent=1 // pred_check_branch
      %36 = sbr.rel (%p34) target = $region25
    $region24: #{tpu_custom_call.1} parent=1 // pred_region
      %vm37 = vcmask 7168
      %38 = vst.msk [vmem:[#allocation2] sm:$0xff] %vm37, -1e+30
      %39 = vst.msk [vmem:[#allocation2 + $0x8] sm:$0xff] %vm37, -1e+30
      %40 = vst.msk [vmem:[#allocation3] sm:$0xff] %vm37, 0.0
      %41 = vst.msk [vmem:[#allocation3 + $0x8] sm:$0xff] %vm37, 0.0
      %42 = vst.msk [vmem:[#allocation4] sm:$0xff] %vm37, 0.0
      %43 = vst.msk [vmem:[#allocation4 + $0x8] sm:$0xff] %vm37, 0.0
      %44 = vst.msk [vmem:[#allocation5] sm:$0xff] %vm37, 0.0
      %45 = vst.msk [vmem:[#allocation5 + $0x8] sm:$0xff] %vm37, 0.0
    $region25: #{tpu_custom_call.1} parent=1 // pred_fallthru
      _
    %v46 = vld [vmem:[%s0] sm:$0xff]
    %v47 = vld [vmem:[%s0 + $0x8] sm:$0xff]
    %v48 = vld [vmem:[#allocation6] sm:$0xff]
    %v49 = vld [vmem:[#allocation6 + $0x8] sm:$0xff]
    %v50 = vld [vmem:[#allocation6 + $0x10] sm:$0xff]
    %v51 = vld [vmem:[#allocation6 + $0x18] sm:$0xff]
    %v52 = vld [vmem:[#allocation6 + $0x20] sm:$0xff]
    %v53 = vld [vmem:[#allocation6 + $0x28] sm:$0xff]
    %v54 = vld [vmem:[#allocation6 + $0x30] sm:$0xff]
    %v55 = vld [vmem:[#allocation6 + $0x38] sm:$0xff]
    %v56 = vld [vmem:[#allocation6 + $0x40] sm:$0xff]
    %v57 = vld [vmem:[#allocation6 + $0x48] sm:$0xff]
    %v58 = vld [vmem:[#allocation6 + $0x50] sm:$0xff]
    %v59 = vld [vmem:[#allocation6 + $0x58] sm:$0xff]
    %v60 = vld [vmem:[#allocation6 + $0x60] sm:$0xff]
    %v61 = vld [vmem:[#allocation6 + $0x68] sm:$0xff]
    %v62 = vld [vmem:[#allocation6 + $0x70] sm:$0xff]
    %v63 = vld [vmem:[#allocation6 + $0x78] sm:$0xff]
    %64 = vmatpush.msra.mxu0 %v63
    %65 = vmatpush.msra.mxu0 %v62
    %66 = vmatpush.msra.mxu0 %v61
    %67 = vmatpush.msra.mxu0 %v60
    %68 = vmatpush.msra.mxu0 %v59
    %69 = vmatpush.msra.mxu0 %v58
    %70 = vmatpush.msra.mxu0 %v57
    %71 = vmatpush.msra.mxu0 %v56
    %72 = vmatpush.msra.mxu0 %v55
    %73 = vmatpush.msra.mxu0 %v54
    %74 = vmatpush.msra.mxu0 %v53
    %75 = vmatpush.msra.mxu0 %v52
    %76 = vmatpush.msra.mxu0 %v51
    %77 = vmatpush.msra.mxu0 %v50
    %78 = vmatpush.msra.mxu0 %v49
    %79 = vmatpush.msra.mxu0 %v48
    %80 = vmatmul.f32.gmra.mxu0 %v46
    %v81 = vpop.f32.mrf.mxu0
    %v82 = vadd.f32 0.0, %v81
    %83 = vmatmul.f32.gmra.mxu0 %v47
    %v84 = vpop.f32.mrf.mxu0
    %v85 = vadd.f32 0.0, %v84
    %86 = vdwg.mxu0
    %s87 = smul.u32 0, 16
    %s88 = smul.u32 0, 128
    %v89 = vlaneseq
    %v90 = vand.u32 %v89, 127
    %v91 = vstv %s88
    %v92 = vadd.s32 %v90, %v91
    %v93 = vlaneseq
    %v94 = vshrl.u32 %v93, 7
    %v95 = vadd.s32 %v94, 8
    %v96 = vstv %s87
    %v97 = vadd.s32 %v94, %v96
    %v98 = vadd.s32 %v95, %v96
    %vm99 = vcmp.lt.s32.totalorder %v92, 16
    %vm100 = vcmp.ne.s32.totalorder %v92, %v97
    %vm101 = vcmp.ne.s32.totalorder %v92, %v98
    %vm102 = vmand %vm99, %vm100
    %vm103 = vmand %vm99, %vm101
    %v104 = vld [vmem:[%s2] sm:$0xff]
    %v105 = vld [vmem:[%s2 + $0x8] sm:$0xff]
    %v106 = vld [vmem:[%s3] sm:$0x1]
    %107 = vset.pattern.permute.xlu0 0
    %108 = vperm.xlu0 %107, %v104
    %v109 = vpop.permute.xlu0 %108
    %110 = vset.pattern.permute.xlu0 0
    %111 = vperm.xlu0 %110, %v105
    %v112 = vpop.permute.xlu0 %111
    %v113 = vperm.slane %v106, 0
    %vm114 = vcmp.eq.s32.totalorder %v109, %v113
    %vm115 = vcmp.eq.s32.totalorder %v112, %v113
    %vm116 = vmand %vm114, %vm102
    %vm117 = vmand %vm115, %vm103
    %v118 = vsel %vm102, %v82, -1e+30
    %v119 = vsel %vm103, %v85, -1e+30
    %120 = vmax.xlane.f32.xlu0 %v118
    %v121 = vpop.xlane.xlu0 %120
    %122 = vmax.xlane.f32.xlu0 %v119
    %v123 = vpop.xlane.xlu0 %122
    %v124 = vld [vmem:[#allocation2] sm:$0xff]
    %v125 = vld [vmem:[#allocation2 + $0x8] sm:$0xff]
    %v126 = vmax.f32 %v124, %v121
    %v127 = vmax.f32 %v125, %v123
    %129 = vset.pattern.permute.xlu0 0
    %130 = vperm.xlu0 %129, %v126
    %v131 = vpop.permute.xlu0 %130
    %134 = vset.pattern.permute.xlu0 0
    %135 = vperm.xlu0 %134, %v127
    %v136 = vpop.permute.xlu0 %135
    %v138 = vsub.f32 %v82, %v131
    %v139 = vsub.f32 %v85, %v136
    %v140 = vmul.f32 %v138, 14.285714
    %v141 = vmul.f32 %v139, 14.285714
    %v142 = vmul.f32 %v140, 1.442695
    %v143 = vpow.pop %v142
    %v144 = vmul.f32 %v141, 1.442695
    %v145 = vpow.pop %v144
    %v146 = vsel %vm102, %v143, 0.0
    %v147 = vsel %vm103, %v145, 0.0
    %v148 = vsub.f32 %v124, %v126
    %v149 = vsub.f32 %v125, %v127
    %v150 = vmul.f32 %v148, 14.285714
    %v151 = vmul.f32 %v149, 14.285714
    %v152 = vmul.f32 %v150, 1.442695
    %v153 = vpow.pop %v152
    %v154 = vmul.f32 %v151, 1.442695
    %v155 = vpow.pop %v154
    %v156 = vld [vmem:[#allocation3] sm:$0xff]
    %v157 = vld [vmem:[#allocation3 + $0x8] sm:$0xff]
    %v158 = vmul.f32 %v153, %v156
    %v159 = vmul.f32 %v155, %v157
    %160 = vadd.xlane.f32.xlu0 %v146
    %v161 = vpop.xlane.xlu0 %160
    %162 = vadd.xlane.f32.xlu0 %v147
    %v163 = vpop.xlane.xlu0 %162
    %v164 = vadd.f32 %v158, %v161
    %v165 = vadd.f32 %v159, %v163
    %vm166 = vcmask 7168
    %167 = vst.msk [vmem:[#allocation3] sm:$0xff] %vm166, %v164
    %168 = vst.msk [vmem:[#allocation3 + $0x8] sm:$0xff] %vm166, %v165
    %169 = vst.msk [vmem:[#allocation2] sm:$0xff] %vm166, %v126
    %170 = vst.msk [vmem:[#allocation2 + $0x8] sm:$0xff] %vm166, %v127
    %v171 = vld [vmem:[#allocation4] sm:$0xff]
    %v172 = vld [vmem:[#allocation4 + $0x8] sm:$0xff]
    %v173 = vsel %vm116, %v82, 0.0
    %v174 = vsel %vm117, %v85, 0.0
    %175 = vadd.xlane.f32.xlu0 %v173
    %v176 = vpop.xlane.xlu0 %175
    %177 = vadd.xlane.f32.xlu0 %v174
    %v178 = vpop.xlane.xlu0 %177
    %v179 = vadd.f32 %v171, %v176
    %v180 = vadd.f32 %v172, %v178
    %181 = vst.msk [vmem:[#allocation4] sm:$0xff] %vm166, %v179
    %182 = vst.msk [vmem:[#allocation4 + $0x8] sm:$0xff] %vm166, %v180
    %v183 = vld [vmem:[#allocation5] sm:$0xff]
    %v184 = vld [vmem:[#allocation5 + $0x8] sm:$0xff]
    %v185 = vsel %vm116, 1.0, 0.0
    %v186 = vsel %vm117, 1.0, 0.0
    %187 = vadd.xlane.f32.xlu0 %v185
    %v188 = vpop.xlane.xlu0 %187
    %189 = vadd.xlane.f32.xlu0 %v186
    %v190 = vpop.xlane.xlu0 %189
    %v191 = vadd.f32 %v183, %v188
    %v192 = vadd.f32 %v184, %v190
    %193 = vst.msk [vmem:[#allocation5] sm:$0xff] %vm166, %v191
    %194 = vst.msk [vmem:[#allocation5 + $0x8] sm:$0xff] %vm166, %v192
    // Predicated region
    $region26: #{tpu_custom_call.1} parent=1 // pred_check
      %p195 = pneg %p33
    $region27: #{tpu_custom_call.1} parent=1 // pred_check_branch
      %197 = sbr.rel (%p195) target = $region29
    $region28: #{tpu_custom_call.1} parent=1 // pred_region
      %v198 = vld [vmem:[#allocation5] sm:$0xff]
      %v199 = vld [vmem:[#allocation5 + $0x8] sm:$0xff]
      %vm200 = vcmp.lt.f32.partialorder %v198, 1e-06
      %vm201 = vcmp.lt.f32.partialorder %v199, 1e-06
      %v202 = vsel %vm200, 1.0, %v198
      %v203 = vsel %vm201, 1.0, %v199
      %v204 = vld [vmem:[#allocation4] sm:$0xff]
      %v205 = vld [vmem:[#allocation4 + $0x8] sm:$0xff]
      %v206 = vmul.f32 %v204, 14.285714
      %v207 = vmul.f32 %v205, 14.285714
      %v208 = vld [vmem:[#allocation2] sm:$0xff]
      %v209 = vld [vmem:[#allocation2 + $0x8] sm:$0xff]
      %v210 = vmul.f32 %v208, 14.285714
      %v211 = vmul.f32 %v209, 14.285714
      %v212 = vld [vmem:[#allocation3] sm:$0xff]
      %v213 = vld [vmem:[#allocation3 + $0x8] sm:$0xff]
      %v214 = vlog2.pop %v212
      %v215 = vmul.f32 %v214, 0.6931472
      %v216 = vlog2.pop %v213
      %v217 = vmul.f32 %v216, 0.6931472
      %v218 = vadd.f32 %v210, %v215
      %v219 = vadd.f32 %v211, %v217
      %v220 = vmul.f32 %v198, %v218
      %v221 = vmul.f32 %v199, %v219
      %v222 = vsub.f32 %v206, %v220
      %v223 = vsub.f32 %v207, %v221
      %v224 = vrcp.pop %v202
      %v225 = vmul.f32 %v202, %v224
      %v226 = vsub.f32 1.0, %v225
      %v227 = vmul.f32 %v224, %v226
      %v228 = vadd.f32 %v224, %v227
      %vm229 = vweird.f32 %v202
      %vm230 = vweird.f32 %v224
      %vm231 = vmor %vm229, %vm230
      %v232 = vsel %vm231, %v224, %v228
      %v233 = vand.u32 2147483647, %v202
      %vm234 = vcmp.eq.f32.partialorder %v233, 8.507059e+37
      %v235 = vand.u32 %v202, 2147483648
      %v236 = vor.u32 1.1754944e-38, %v235
      %v237 = vsel %vm234, %v236, %v232
      %v238 = vmul.f32 %v222, %v237
      %v239 = vrcp.pop %v203
      %v240 = vmul.f32 %v203, %v239
      %v241 = vsub.f32 1.0, %v240
      %v242 = vmul.f32 %v239, %v241
      %v243 = vadd.f32 %v239, %v242
      %vm244 = vweird.f32 %v203
      %vm245 = vweird.f32 %v239
      %vm246 = vmor %vm244, %vm245
      %v247 = vsel %vm246, %v239, %v243
      %v248 = vand.u32 2147483647, %v203
      %vm249 = vcmp.eq.f32.partialorder %v248, 8.507059e+37
      %v250 = vand.u32 %v203, 2147483648
      %v251 = vor.u32 1.1754944e-38, %v250
      %v252 = vsel %vm249, %v251, %v247
      %v253 = vmul.f32 %v223, %v252
      %v254 = vmul.f32 %v238, -1.0
      %v255 = vmul.f32 %v253, -1.0
      %256 = vst.msk [vmem:[%s4] sm:$0xff] %vm166, %v254
      %257 = vst.msk [vmem:[%s4 + $0x8] sm:$0xff] %vm166, %v255
    $region29: #{tpu_custom_call.1} parent=1 // pred_fallthru
      _
    // Predicated region
    $region30: #{tpu_custom_call.1} parent=1 // pred_check
      _
    $region31: #{tpu_custom_call.1} parent=1 // pred_check_branch
      %259 = sbr.rel (0) target = $region33
    $region32: #{tpu_custom_call.1} parent=1 // pred_region
      _
    $region33: #{tpu_custom_call.1} parent=1 // pred_fallthru
      _
    // Predicated region
    $region34: #{tpu_custom_call.1} parent=1 // pred_check
      _
    $region35: #{tpu_custom_call.1} parent=1 // pred_check_branch
      %261 = sbr.rel (0) target = $region37
    $region36: #{tpu_custom_call.1} parent=1 // pred_region
      _
    $region37: #{tpu_custom_call.1} parent=1 // pred_fallthru
      _
    %262 = vsyncpa [#allocation7], 1

</llo_original>
